<compile_context>
chip_gen: v6e
topology: v6e:2x2x1
jax: 0.10.0
libtpu: 0.0.40
codegen_flags: <defaults>
</compile_context>

<pallas_src>
import numpy as np
import jax
import jax.numpy as jnp
from jax import lax
from jax.experimental import pallas as pl
from jax.experimental.pallas import tpu as pltpu


# ----------------------------------------------------------------------------
# Fused kernel: 2x2 patch merge + LayerNorm(4C) + Linear(4C -> Cout) (affine/bias folded)
# ----------------------------------------------------------------------------
def _merge_ln_reduce_kernel(a_ref, w_ref, b_ref, o_ref):
    # a_ref : (TR, 2, W2, 2C)  row-pair tile; last dim packs (w parity, channel)
    # w_ref : (4C, Cout)       bf16, rows permuted to kernel feature order, LN gamma folded in
    # b_ref : (1, Cout)        f32, beta @ W_red.T (permutation-invariant)
    # o_ref : (TR, W2, Cout)   dtype follows the activation dtype
    TR, _, W2, twoC = a_ref.shape
    fourC = 2 * twoC
    cout = o_ref.shape[-1]

    a = a_ref[...]
    # Lane-axis concat of the two h-parity halves -> (TR, W2, 4C); flatten rows for one 2-D
    # MXU contraction.  TR is a multiple of 8, so the flatten is layout-free when W2 % 8 == 0.
    # TODO(synk): for stages where W2 % 8 != 0 (7/14/28) this reshape costs a relayout; padding
    # W2 up in the wrapper (or a rank-3 contraction) would avoid it.
    x = jnp.concatenate([a[:, 0, :, :], a[:, 1, :, :]], axis=-1).astype(jnp.float32)
    x = x.reshape(TR * W2, fourC)

    # One-pass LayerNorm statistics over the 4C merged features (kept in f32).
    inv_n = 1.0 / fourC
    s1 = jnp.sum(x, axis=-1, keepdims=True)
    s2 = jnp.sum(x * x, axis=-1, keepdims=True)
    mu = s1 * inv_n
    var = s2 * inv_n - mu * mu
    xn = (x - mu) * lax.rsqrt(var + 1e-5)

    # Single wide bf16 MXU contraction over K = 4C (gamma already folded into w_ref).
    y = jnp.dot(xn.astype(jnp.bfloat16), w_ref[...], preferred_element_type=jnp.float32)
    y = y + b_ref[...]
    o_ref[...] = y.reshape(TR, W2, cout).astype(o_ref.dtype)


# ----------------------------------------------------------------------------
# Row-tile selection (no divisor requirement; cdiv grid handles the ragged tail)
# ----------------------------------------------------------------------------
def _pick_row_tile(R, row_bytes, target_block_bytes=6 << 20, min_grid_steps=4):
    """Largest multiple of 8 whose in+out block stays under ~target_block_bytes, capped so the
    grid keeps at least `min_grid_steps` steps (v7x megacore sharding + pipeline overlap)."""
    cap = max(1, int(target_block_bytes) // max(1, int(row_bytes)))
    cap = min(cap, max(1, pl.cdiv(R, min_grid_steps)))
    if cap >= 8:
        cap = (cap // 8) * 8            # sublane-aligned row tile
    return int(min(cap, R))


# ----------------------------------------------------------------------------
# Forward wrapper
# ----------------------------------------------------------------------------
def patch_merging2d_forward(params, x):
    """x: (..., H, W, C) channel-last -> (..., ceil(H/2), ceil(W/2), Cout), dtype follows x."""
    lead = x.shape[:-3]
    H, W, C = x.shape[-3:]

    # Zero-pad H, W up to even (matches torch F.pad); only runs for odd sizes.
    # TODO(synk): for odd H/W this materializes a padded copy in HBM; the edge row/column could
    # instead be handled with masked loads to avoid the extra read+write pass.
    ph, pw = H % 2, W % 2
    if ph or pw:
        pad = [(0, 0)] * (x.ndim - 3) + [(0, ph), (0, pw), (0, 0)]
        x = jnp.pad(x, pad)
    Hp, Wp = H + ph, W + pw
    H2, W2 = Hp // 2, Wp // 2
    R = int(np.prod(lead, dtype=np.int64)) * H2

    # Free contiguous re-view: (..., Hp, Wp, C) -> (R, 2, W2, 2C).
    a = x.reshape(R, 2, W2, 2 * C)

    w = params["w"]          # (4C, Cout) bf16, gamma folded, kernel feature order
    bias = params["bias"]    # (1, Cout)  f32
    cout = w.shape[1]

    itemsize = jnp.dtype(x.dtype).itemsize
    in_row = 2 * W2 * 2 * C * itemsize
    out_row = W2 * cout * itemsize
    TR = _pick_row_tile(R, in_row + out_row)
    grid = (pl.cdiv(R, TR),)

    # Explicit VMEM budget: double-buffered in/out blocks + double-buffered constants + slack.
    needed = (2 * TR * (in_row + out_row)
              + 2 * (w.size * w.dtype.itemsize + bias.size * bias.dtype.itemsize)
              + (4 << 20))
    vmem_limit = int(min(max(needed, 32 << 20), 128 << 20))

    out = pl.pallas_call(
        _merge_ln_reduce_kernel,
        out_shape=jax.ShapeDtypeStruct((R, W2, cout), x.dtype),
        grid=grid,
        in_specs=[
            pl.BlockSpec((TR, 2, W2, 2 * C), lambda i: (i, 0, 0, 0)),
            pl.BlockSpec((4 * C, cout), lambda i: (0, 0)),
            pl.BlockSpec((1, cout), lambda i: (0, 0)),
        ],
        out_specs=pl.BlockSpec((TR, W2, cout), lambda i: (i, 0, 0)),
        compiler_params=pltpu.CompilerParams(
            dimension_semantics=("parallel",),
            vmem_limit_bytes=vmem_limit),
    )(a, w, bias)

    return out.reshape(*lead, H2, W2, cout)


# ----------------------------------------------------------------------------
# Parameter preparation: fold LN affine into the reduction weight + permute to kernel order
# ----------------------------------------------------------------------------
def make_params(reduction_weight, ln_gamma, ln_beta):
    """reduction_weight: (Cout, 4C) torch nn.Linear weight (bias=False);
    ln_gamma/ln_beta: (4C,) LayerNorm affine.

    Kernel feature order is [(h0,w0),(h0,w1),(h1,w0),(h1,w1)]; torch cat order is
    [(h0,w0),(h1,w0),(h0,w1),(h1,w1)] -> blocks 1 and 2 swap.  LayerNorm stats are
    permutation-invariant, so permuting gamma-folded weight rows is exact.  The beta term is
    folded into a bias: beta @ W_red.T (also permutation-invariant).
    """
    w = np.asarray(reduction_weight, np.float32)   # (Cout, 4C)
    g = np.asarray(ln_gamma, np.float32)           # (4C,)
    b = np.asarray(ln_beta, np.float32)            # (4C,)
    fourC = w.shape[1]
    C = fourC // 4
    perm = np.concatenate([np.arange(0, C), np.arange(2 * C, 3 * C),
                           np.arange(C, 2 * C), np.arange(3 * C, 4 * C)])
    w_t = w.T                                      # (4C, Cout), torch feature order
    bias = b @ w_t                                 # (Cout,)
    w_fold = (g[:, None] * w_t)[perm, :]           # fold gamma, permute rows to kernel order
    return dict(
        w=jnp.asarray(w_fold, jnp.bfloat16),
        bias=jnp.asarray(bias, jnp.float32).reshape(1, -1),
    )


# ----------------------------------------------------------------------------
# Pure-JAX reference (mirrors the PyTorch module) for validation
# ----------------------------------------------------------------------------
def reference_forward(x, ln_gamma, ln_beta, reduction_weight, eps=1e-5):
    H, W = x.shape[-3], x.shape[-2]
    if H % 2 or W % 2:
        pad = [(0, 0)] * (x.ndim - 3) + [(0, H % 2), (0, W % 2), (0, 0)]
        x = jnp.pad(x, pad)
    x0 = x[..., 0::2, 0::2, :]
    x1 = x[..., 1::2, 0::2, :]
    x2 = x[..., 0::2, 1::2, :]
    x3 = x[..., 1::2, 1::2, :]
    xc = jnp.concatenate([x0, x1, x2, x3], axis=-1)
    mu = xc.mean(-1, keepdims=True)
    var = ((xc - mu) ** 2).mean(-1, keepdims=True)
    xn = (xc - mu) * lax.rsqrt(var + eps) * ln_gamma + ln_beta
    return jnp.matmul(xn, jnp.asarray(reduction_weight, jnp.float32).T,
                      precision=lax.Precision.HIGHEST)


if __name__ == "__main__":
    # Small video-shaped input: (B, T, H, W, dim); dim=64 keeps 2C/4C/Cout lane-dense (>=128).
    B, T, H, W, dim = 2, 2, 16, 16, 64
    out_dim = 2 * dim

    key = jax.random.PRNGKey(0)
    kx, kw, kg, kb = jax.random.split(key, 4)
    x = jax.random.normal(kx, (B, T, H, W, dim), jnp.float32)
    reduction_w = jax.random.normal(kw, (out_dim, 4 * dim), jnp.float32) * (4 * dim) ** -0.5
    ln_gamma = 1.0 + 0.1 * jax.random.normal(kg, (4 * dim,), jnp.float32)
    ln_beta = 0.1 * jax.random.normal(kb, (4 * dim,), jnp.float32)

    params = make_params(reduction_w, ln_gamma, ln_beta)
    fwd = jax.jit(patch_merging2d_forward)
    ref = reference_forward(x, ln_gamma, ln_beta, reduction_w)

    # f32 activations in / f32 out (bf16 MXU operands inside the kernel).
    out_f32 = jax.block_until_ready(fwd(params, x))
    assert out_f32.shape == (B, T, H // 2, W // 2, out_dim), out_f32.shape
    assert out_f32.dtype == jnp.float32
    assert bool(jnp.all(jnp.isfinite(out_f32)))
    np.testing.assert_allclose(np.asarray(out_f32), np.asarray(ref), rtol=3e-2, atol=3e-2)

    # bf16 activations in / bf16 out (the bandwidth-optimal production path).
    out_bf16 = jax.block_until_ready(fwd(params, x.astype(jnp.bfloat16)))
    assert out_bf16.dtype == jnp.bfloat16
    np.testing.assert_allclose(np.asarray(out_bf16.astype(jnp.float32)), np.asarray(ref),
                               rtol=6e-2, atol=6e-2)

    print("KERNEL_OK")
</pallas_src>

<mosaic_0001>
module attributes {stable_mosaic.version = 11 : i64} {
  func.func @_merge_ln_reduce_kernel(%arg0: i32, %arg1: memref<8x2x8x128xf32, #tpu.memory_space<vmem>>, %arg2: memref<256x128xbf16, #tpu.memory_space<vmem>>, %arg3: memref<1x128xf32, #tpu.memory_space<vmem>>, %arg4: memref<8x8x128xf32, #tpu.memory_space<vmem>>) attributes {dimension_semantics = [#tpu.dimension_semantics<parallel>], iteration_bounds = array<i64: 4>, scalar_prefetch = 0 : i64, scratch_operands = 0 : i64, tpu.core_type = #tpu.core_type<tc>, window_params = [{transform_indices = @transform_0, window_bounds = array<i64: 8, 2, 8, 128>}, {pipeline_mode = #tpu.pipeline_mode<synchronous>, transform_indices = @transform_1, window_bounds = array<i64: 256, 128>}, {pipeline_mode = #tpu.pipeline_mode<synchronous>, transform_indices = @transform_2, window_bounds = array<i64: 1, 128>}, {transform_indices = @transform_3, window_bounds = array<i64: 8, 8, 128>}]} {
    %c0 = arith.constant 0 : index
    %c0_0 = arith.constant 0 : index
    %c0_1 = arith.constant 0 : index
    %c0_2 = arith.constant 0 : index
    %0 = vector.load %arg1[%c0, %c0_0, %c0_1, %c0_2] : memref<8x2x8x128xf32, #tpu.memory_space<vmem>>, vector<8x2x8x128xf32>
    %1 = vector.extract_strided_slice %0 {offsets = [0, 0, 0, 0], sizes = [8, 1, 8, 128], strides = [1, 1, 1, 1]} : vector<8x2x8x128xf32> to vector<8x1x8x128xf32>
    %2 = vector.shape_cast %1 : vector<8x1x8x128xf32> to vector<8x8x128xf32>
    %3 = vector.extract_strided_slice %0 {offsets = [0, 1, 0, 0], sizes = [8, 1, 8, 128], strides = [1, 1, 1, 1]} : vector<8x2x8x128xf32> to vector<8x1x8x128xf32>
    %4 = vector.shape_cast %3 : vector<8x1x8x128xf32> to vector<8x8x128xf32>
    %5 = tpu.concatenate %2, %4 in 2 : vector<8x8x128xf32>, vector<8x8x128xf32> -> vector<8x8x256xf32>
    %6 = vector.shape_cast %5 : vector<8x8x256xf32> to vector<64x256xf32>
    %cst = arith.constant dense<0.000000e+00> : vector<64xf32>
    %7 = vector.multi_reduction <add>, %6, %cst [1] : vector<64x256xf32> to vector<64xf32>
    %8 = vector.shape_cast %7 : vector<64xf32> to vector<64x1xf32>
    %9 = arith.mulf %6, %6 : vector<64x256xf32>
    %cst_3 = arith.constant dense<0.000000e+00> : vector<64xf32>
    %10 = vector.multi_reduction <add>, %9, %cst_3 [1] : vector<64x256xf32> to vector<64xf32>
    %11 = vector.shape_cast %10 : vector<64xf32> to vector<64x1xf32>
    %cst_4 = arith.constant 3.906250e-03 : f32
    %12 = vector.broadcast %cst_4 : f32 to vector<64x1xf32>
    %13 = arith.mulf %8, %12 : vector<64x1xf32>
    %cst_5 = arith.constant 3.906250e-03 : f32
    %14 = vector.broadcast %cst_5 : f32 to vector<64x1xf32>
    %15 = arith.mulf %11, %14 : vector<64x1xf32>
    %16 = arith.mulf %13, %13 : vector<64x1xf32>
    %17 = arith.subf %15, %16 : vector<64x1xf32>
    %18 = vector.broadcast %13 : vector<64x1xf32> to vector<64x256xf32>
    %19 = arith.subf %6, %18 : vector<64x256xf32>
    %cst_6 = arith.constant 9.99999974E-6 : f32
    %20 = vector.broadcast %cst_6 : f32 to vector<64x1xf32>
    %21 = arith.addf %17, %20 : vector<64x1xf32>
    %22 = math.rsqrt %21 : vector<64x1xf32>
    %23 = vector.broadcast %22 : vector<64x1xf32> to vector<64x256xf32>
    %24 = arith.mulf %19, %23 : vector<64x256xf32>
    %25 = arith.truncf %24 : vector<64x256xf32> to vector<64x256xbf16>
    %c0_7 = arith.constant 0 : index
    %c0_8 = arith.constant 0 : index
    %26 = vector.load %arg2[%c0_7, %c0_8] : memref<256x128xbf16, #tpu.memory_space<vmem>>, vector<256x128xbf16>
    %cst_9 = arith.constant dense<0.000000e+00> : vector<64x128xf32>
    %27 = tpu.matmul %25, %26, %cst_9 {dimension_numbers = #tpu.dot_dimension_numbers<[1], [0], [0], [1], [0, 0, 1, 1], [], []>} : vector<64x256xbf16>, vector<256x128xbf16>, vector<64x128xf32> -> vector<64x128xf32>
    %c0_10 = arith.constant 0 : index
    %c0_11 = arith.constant 0 : index
    %28 = vector.load %arg3[%c0_10, %c0_11] : memref<1x128xf32, #tpu.memory_space<vmem>>, vector<1x128xf32>
    %29 = vector.broadcast %28 : vector<1x128xf32> to vector<64x128xf32>
    %30 = arith.addf %27, %29 : vector<64x128xf32>
    %31 = vector.shape_cast %30 : vector<64x128xf32> to vector<8x8x128xf32>
    %c0_12 = arith.constant 0 : index
    %c0_13 = arith.constant 0 : index
    %c0_14 = arith.constant 0 : index
    %32 = vector.load %arg4[%c0_12, %c0_13, %c0_14] : memref<8x8x128xf32, #tpu.memory_space<vmem>>, vector<8x8x128xf32>
    tpu.vector_store %arg4[%c0_12, %c0_13, %c0_14], %31 {strides = array<i32>} : memref<8x8x128xf32, #tpu.memory_space<vmem>>, vector<8x8x128xf32>,
    return
  }
  func.func @transform_0(%arg0: i32) -> (i32, i32, i32, i32) {
    %c0_i32 = arith.constant 0 : i32
    %c0_i32_0 = arith.constant 0 : i32
    %c0_i32_1 = arith.constant 0 : i32
    %c0_i32_2 = arith.constant 0 : i32
    return %arg0, %c0_i32, %c0_i32_0, %c0_i32_1 : i32, i32, i32, i32
  }
  func.func @transform_1(%arg0: i32) -> (i32, i32) {
    %c0_i32 = arith.constant 0 : i32
    %c0_i32_0 = arith.constant 0 : i32
    %c0_i32_1 = arith.constant 0 : i32
    return %c0_i32, %c0_i32_0 : i32, i32
  }
  func.func @transform_2(%arg0: i32) -> (i32, i32) {
    %c0_i32 = arith.constant 0 : i32
    %c0_i32_0 = arith.constant 0 : i32
    %c0_i32_1 = arith.constant 0 : i32
    return %c0_i32, %c0_i32_0 : i32, i32
  }
  func.func @transform_3(%arg0: i32) -> (i32, i32, i32) {
    %c0_i32 = arith.constant 0 : i32
    %c0_i32_0 = arith.constant 0 : i32
    %c0_i32_1 = arith.constant 0 : i32
    return %arg0, %c0_i32, %c0_i32_0 : i32, i32, i32
  }
}

</mosaic_0001>

<llo_original>
// kernel: patch_merging2d_forward.1
$region0: #{patch_merging2d_forward.1}
  #allocation0 [shape = 'u32[]', space=smem, size = 0x4, offset = 0x4, fixed_abs, tag = 'smem constant byte address 0x4 - core index']
  #allocation1 [shape = 'u32[144,128]{1,0:T(1,128)}', space=vmem, size = 0x12000, scoped, tag = 'internal scratch']
  %s0 = inlined_call_operand.vmem [shape: f32[32,2,8,128], index: 0, kind: input, shape index: {}]
  %s1 = inlined_call_operand.vmem [shape: bf16[256,128], index: 1, kind: input, shape index: {}]
  %s2 = inlined_call_operand.vmem [shape: f32[1,128], index: 2, kind: input, shape index: {}]
  %s3 = inlined_call_operand.hbm [shape: f32[32,8,128], index: 3, kind: output, shape index: {}]
  %s4 = sld [smem:[#allocation0]]
  $region45: #{patch_merging2d_forward.1} parent=0
    _
  %s6 = ssub.s32 1, %s4
  %s7 = scalar_select 0, %s6, %s4
  $region1: #{patch_merging2d_forward.1} parent=0
    #allocation2 [shape = 'u8[65536]{0}', space=vmem, size = 0x10000, scoped, tag = 'output window, operand 0']
    #allocation3 [shape = 's32[2]{0}', space=sflag, size = 0x8, scoped, tag = 'scoped memory for patch_merging2d_forward.1']
    %8 = vsyncpa [#allocation3], 0
    %s9 = scalar_lea.sflag [#allocation3], 1
    %10 = vsyncpa %s9, 0
    loop: start=0, step=1, limit=6
    $region2: #{patch_merging2d_forward.1} parent=1 // loop_pre_header
      _
    $region3: #{patch_merging2d_forward.1} parent=1 // loop_header
      %s12 = sphi 0, %s16
      %p13 = scmp.ge.s32.totalorder %s12, 6
      %s22 = sphi 0, %s24
      %s25 = sphi 0, %s22
      %s26 = sphi 0, %s25
      %s42 = sphi 0, %s26
      %s46 = sphi 0, %s46
      %s48 = sphi 0, %s46
      %s49 = sphi 0, %s48
      %s63 = sphi 0, %s49
      %s67 = sphi 0, %s67
      %s69 = sphi 0, %s67
      %s70 = sphi 0, %s69
      %s84 = sphi 0, %s70
      %s90 = sphi 0, %s92
      %s93 = sphi 0, %s90
      %s94 = sphi 0, %s93
      %s110 = sphi 0, %s94
    $region4: #{patch_merging2d_forward.1} parent=1 // loop_header_branch
      %15 = sbr.rel (%p13) target = $region8
    $region5: #{patch_merging2d_forward.1} parent=1 // loop_body
      %s17 = ssub.s32 %s12, 1
      %s18 = ssub.s32 %s12, 2
      %s19 = sadd.s32 %s12, 1
      %s20 = ssub.s32 %s12, %s19
      %p21 = scmp.eq.s32.totalorder %s20, 0
      %s23 = sadd.s32 %s22, 1
      %s24 = scalar_select %p21, %s22, %s23
      %p27 = pneg %p21
      %p28 = scmp.eq.s32.totalorder %s12, 3
      %p29 = por %p27, %p28
      %p30 = scmp.ne.s32.totalorder %s22, %s25
      %p31 = scmp.eq.s32.totalorder %s12, 0
      %p32 = por %p30, %p31
      %p33 = scmp.ne.s32.totalorder %s22, %s25
      %p34 = scmp.eq.s32.totalorder %s17, 3
      %p35 = por %p33, %p34
      %p36 = scmp.ne.s32.totalorder %s25, %s26
      %p37 = scmp.eq.s32.totalorder %s17, 0
      %p38 = por %p36, %p37
      %p39 = scmp.ne.s32.totalorder %s25, %s26
      %p40 = scmp.eq.s32.totalorder %s18, 3
      %p41 = por %p39, %p40
      %p43 = scmp.ne.s32.totalorder %s26, %s42
      %p44 = scmp.eq.s32.totalorder %s18, 0
      %p45 = por %p43, %p44
      %s47 = sadd.s32 %s46, 1
      %p50 = scmp.eq.s32.totalorder %s12, 3
      %p51 = scmp.ne.s32.totalorder %s46, %s48
      %p52 = scmp.eq.s32.totalorder %s12, 0
      %p53 = por %p51, %p52
      %p54 = scmp.ne.s32.totalorder %s46, %s48
      %p55 = scmp.eq.s32.totalorder %s17, 3
      %p56 = por %p54, %p55
      %p57 = scmp.ne.s32.totalorder %s48, %s49
      %p58 = scmp.eq.s32.totalorder %s17, 0
      %p59 = por %p57, %p58
      %p60 = scmp.ne.s32.totalorder %s48, %s49
      %p61 = scmp.eq.s32.totalorder %s18, 3
      %p62 = por %p60, %p61
      %p64 = scmp.ne.s32.totalorder %s49, %s63
      %p65 = scmp.eq.s32.totalorder %s18, 0
      %p66 = por %p64, %p65
      %s68 = sadd.s32 %s67, 1
      %p71 = scmp.eq.s32.totalorder %s12, 3
      %p72 = scmp.ne.s32.totalorder %s67, %s69
      %p73 = scmp.eq.s32.totalorder %s12, 0
      %p74 = por %p72, %p73
      %p75 = scmp.ne.s32.totalorder %s67, %s69
      %p76 = scmp.eq.s32.totalorder %s17, 3
      %p77 = por %p75, %p76
      %p78 = scmp.ne.s32.totalorder %s69, %s70
      %p79 = scmp.eq.s32.totalorder %s17, 0
      %p80 = por %p78, %p79
      %p81 = scmp.ne.s32.totalorder %s69, %s70
      %p82 = scmp.eq.s32.totalorder %s18, 3
      %p83 = por %p81, %p82
      %p85 = scmp.ne.s32.totalorder %s70, %s84
      %p86 = scmp.eq.s32.totalorder %s18, 0
      %p87 = por %p85, %p86
      %s88 = ssub.s32 %s12, %s19
      %p89 = scmp.eq.s32.totalorder %s88, 0
      %s91 = sadd.s32 %s90, 1
      %s92 = scalar_select %p89, %s90, %s91
      %p95 = pneg %p89
      %p96 = scmp.eq.s32.totalorder %s12, 3
      %p97 = por %p95, %p96
      %p98 = scmp.ne.s32.totalorder %s90, %s93
      %p99 = scmp.eq.s32.totalorder %s12, 0
      %p100 = por %p98, %p99
      %p101 = scmp.ne.s32.totalorder %s90, %s93
      %p102 = scmp.eq.s32.totalorder %s17, 3
      %p103 = por %p101, %p102
      %p104 = scmp.ne.s32.totalorder %s93, %s94
      %p105 = scmp.eq.s32.totalorder %s17, 0
      %p106 = por %p104, %p105
      %p107 = scmp.ne.s32.totalorder %s93, %s94
      %p108 = scmp.eq.s32.totalorder %s18, 3
      %p109 = por %p107, %p108
      %p111 = scmp.ne.s32.totalorder %s94, %s110
      %p112 = scmp.eq.s32.totalorder %s18, 0
      %p113 = por %p111, %p112
      %p114 = scmp.le.s32.totalorder 1, %s12
      %p115 = scmp.lt.s32.totalorder %s12, 5
      %p116 = pnand %p114, %p115
      %p117 = pneg %p116
      // Predicated region
      $region9: #{patch_merging2d_forward.1} parent=5 // pred_check
        _
      $region10: #{patch_merging2d_forward.1} parent=5 // pred_check_branch
        %119 = sbr.rel (%p116) target = $region12
      $region11: #{patch_merging2d_forward.1} parent=5 // pred_region
        %s120 = ssub.s32 %s12, 1
        // Predicated region
        $region13: #{patch_merging2d_forward.1} parent=11 // pred_check
          %p121 = pneg %p59
        $region14: #{patch_merging2d_forward.1} parent=11 // pred_check_branch
          %123 = sbr.rel (%p121) target = $region16
        $region15: #{patch_merging2d_forward.1} parent=11 // pred_region
          _
        $region16: #{patch_merging2d_forward.1} parent=11 // pred_fallthru
          _
        // Predicated region
        $region17: #{patch_merging2d_forward.1} parent=11 // pred_check
          %p124 = pneg %p80
        $region18: #{patch_merging2d_forward.1} parent=11 // pred_check_branch
          %126 = sbr.rel (%p124) target = $region20
        $region19: #{patch_merging2d_forward.1} parent=11 // pred_region
          _
        $region20: #{patch_merging2d_forward.1} parent=11 // pred_fallthru
          _
      $region12: #{patch_merging2d_forward.1} parent=5 // pred_fallthru
        _
      %p127 = scmp.lt.s32.totalorder %s12, 4
      // Predicated region
      $region21: #{patch_merging2d_forward.1} parent=5 // pred_check
        %p128 = pneg %p127
      $region22: #{patch_merging2d_forward.1} parent=5 // pred_check_branch
        %130 = sbr.rel (%p128) target = $region24
      $region23: #{patch_merging2d_forward.1} parent=5 // pred_region
        // Predicated region
        $region25: #{patch_merging2d_forward.1} parent=23 // pred_check
          %p131 = pneg %p32
        $region26: #{patch_merging2d_forward.1} parent=23 // pred_check_branch
          %133 = sbr.rel (%p131) target = $region28
        $region27: #{patch_merging2d_forward.1} parent=23 // pred_region
          %s134 = smul.u32 8, %s12
          %p135 = scmp.lt.s32.totalorder %s134, 31
          %s136 = scalar_select %p135, %s134, 31
          %s137 = smul.addr %s136, 2
          %s138 = smul.addr %s137, 8
          %s139 = scalar_lea.vmem %s0, %s138
          %s140 = smul.u32 8, %s12
        $region28: #{patch_merging2d_forward.1} parent=23 // pred_fallthru
          _
      $region24: #{patch_merging2d_forward.1} parent=5 // pred_fallthru
        _
      %p141 = scmp.le.s32.totalorder 1, %s12
      %p142 = scmp.lt.s32.totalorder %s12, 5
      %p143 = pnand %p141, %p142
      %p144 = pneg %p143
      // Predicated region
      $region29: #{patch_merging2d_forward.1} parent=5 // pred_check
        _
      $region30: #{patch_merging2d_forward.1} parent=5 // pred_check_branch
        %146 = sbr.rel (%p143) target = $region32
      $region31: #{patch_merging2d_forward.1} parent=5 // pred_region
        %s147 = ssub.s32 %s12, 1
        %s148 = smul.u32 8, %s17
        %p149 = scmp.lt.s32.totalorder %s148, 31
        %s150 = scalar_select %p149, %s148, 31
        %s151 = smul.addr %s150, 2
        %s152 = smul.addr %s151, 8
        %s153 = scalar_lea.vmem %s0, %s152
        %p154 = pneg %p38
        %p155 = pneg %p35
        %p156 = pneg %p59
        %p157 = pneg %p56
        %p158 = pneg %p80
        %p159 = pneg %p77
        %p160 = pneg %p106
        %p161 = pneg %p103
        %s162 = sand.u32 %s93, 1
        %s163 = scalar_lea.sflag [#allocation3], %s162
        %s164 = sand.u32 %s93, 1
        %s165 = smul.addr %s164, 64
        %s166 = scalar_lea.vmem [#allocation2], %s165
        %s167 = smul.u32 8, %s17
        %p168 = scmp.lt.s32.totalorder %s167, 31
        %s169 = scalar_select %p168, %s167, 31
        %s170 = smul.addr %s169, 2
        %s171 = smul.addr %s170, 8
        %s172 = scalar_lea.vmem %s0, %s171
        %s173 = smul.u32 8, %s17
        %s174 = smul.u32 8, %s17
        %v176 = vld [vmem:[%s172] sm:$0xff]
        %v177 = vld [vmem:[%s172 + $0x8] sm:$0xff]
        %v178 = vld [vmem:[%s172 + $0x10] sm:$0xff]
        %v179 = vld [vmem:[%s172 + $0x18] sm:$0xff]
        %v180 = vld [vmem:[%s172 + $0x20] sm:$0xff]
        %v181 = vld [vmem:[%s172 + $0x28] sm:$0xff]
        %v182 = vld [vmem:[%s172 + $0x30] sm:$0xff]
        %v183 = vld [vmem:[%s172 + $0x38] sm:$0xff]
        %v184 = vld [vmem:[%s172 + $0x40] sm:$0xff]
        %v185 = vld [vmem:[%s172 + $0x48] sm:$0xff]
        %v186 = vld [vmem:[%s172 + $0x50] sm:$0xff]
        %v187 = vld [vmem:[%s172 + $0x58] sm:$0xff]
        %v188 = vld [vmem:[%s172 + $0x60] sm:$0xff]
        %v189 = vld [vmem:[%s172 + $0x68] sm:$0xff]
        %v190 = vld [vmem:[%s172 + $0x70] sm:$0xff]
        %v191 = vld [vmem:[%s172 + $0x78] sm:$0xff]
        %v192 = vadd.f32 %v176, %v177
        %193 = vadd.xlane.f32.xlu0 %v192
        %v194 = vpop.xlane.xlu0 %193
        %v195 = vadd.f32 %v178, %v179
        %196 = vadd.xlane.f32.xlu0 %v195
        %v197 = vpop.xlane.xlu0 %196
        %v198 = vadd.f32 %v180, %v181
        %199 = vadd.xlane.f32.xlu0 %v198
        %v200 = vpop.xlane.xlu0 %199
        %v201 = vadd.f32 %v182, %v183
        %202 = vadd.xlane.f32.xlu0 %v201
        %v203 = vpop.xlane.xlu0 %202
        %v204 = vadd.f32 %v184, %v185
        %205 = vadd.xlane.f32.xlu0 %v204
        %v206 = vpop.xlane.xlu0 %205
        %v207 = vadd.f32 %v186, %v187
        %208 = vadd.xlane.f32.xlu0 %v207
        %v209 = vpop.xlane.xlu0 %208
        %v210 = vadd.f32 %v188, %v189
        %211 = vadd.xlane.f32.xlu0 %v210
        %v212 = vpop.xlane.xlu0 %211
        %v213 = vadd.f32 %v190, %v191
        %214 = vadd.xlane.f32.xlu0 %v213
        %v215 = vpop.xlane.xlu0 %214
        %v216 = vmul.f32 %v176, %v176
        %v217 = vmul.f32 %v177, %v177
        %v218 = vmul.f32 %v178, %v178
        %v219 = vmul.f32 %v179, %v179
        %v220 = vmul.f32 %v180, %v180
        %v221 = vmul.f32 %v181, %v181
        %v222 = vmul.f32 %v182, %v182
        %v223 = vmul.f32 %v183, %v183
        %v224 = vmul.f32 %v184, %v184
        %v225 = vmul.f32 %v185, %v185
        %v226 = vmul.f32 %v186, %v186
        %v227 = vmul.f32 %v187, %v187
        %v228 = vmul.f32 %v188, %v188
        %v229 = vmul.f32 %v189, %v189
        %v230 = vmul.f32 %v190, %v190
        %v231 = vmul.f32 %v191, %v191
        %v232 = vadd.f32 %v216, %v217
        %233 = vadd.xlane.f32.xlu0 %v232
        %v234 = vpop.xlane.xlu0 %233
        %v235 = vadd.f32 %v218, %v219
        %236 = vadd.xlane.f32.xlu0 %v235
        %v237 = vpop.xlane.xlu0 %236
        %v238 = vadd.f32 %v220, %v221
        %239 = vadd.xlane.f32.xlu0 %v238
        %v240 = vpop.xlane.xlu0 %239
        %v241 = vadd.f32 %v222, %v223
        %242 = vadd.xlane.f32.xlu0 %v241
        %v243 = vpop.xlane.xlu0 %242
        %v244 = vadd.f32 %v224, %v225
        %245 = vadd.xlane.f32.xlu0 %v244
        %v246 = vpop.xlane.xlu0 %245
        %v247 = vadd.f32 %v226, %v227
        %248 = vadd.xlane.f32.xlu0 %v247
        %v249 = vpop.xlane.xlu0 %248
        %v250 = vadd.f32 %v228, %v229
        %251 = vadd.xlane.f32.xlu0 %v250
        %v252 = vpop.xlane.xlu0 %251
        %v253 = vadd.f32 %v230, %v231
        %254 = vadd.xlane.f32.xlu0 %v253
        %v255 = vpop.xlane.xlu0 %254
        %v256 = vmul.f32 %v194, 0.00390625
        %v257 = vmul.f32 %v197, 0.00390625
        %v258 = vmul.f32 %v200, 0.00390625
        %v259 = vmul.f32 %v203, 0.00390625
        %v260 = vmul.f32 %v206, 0.00390625
        %v261 = vmul.f32 %v209, 0.00390625
        %v262 = vmul.f32 %v212, 0.00390625
        %v263 = vmul.f32 %v215, 0.00390625
        %v264 = vmul.f32 %v234, 0.00390625
        %v265 = vmul.f32 %v237, 0.00390625
        %v266 = vmul.f32 %v240, 0.00390625
        %v267 = vmul.f32 %v243, 0.00390625
        %v268 = vmul.f32 %v246, 0.00390625
        %v269 = vmul.f32 %v249, 0.00390625
        %v270 = vmul.f32 %v252, 0.00390625
        %v271 = vmul.f32 %v255, 0.00390625
        %v272 = vmul.f32 %v256, %v256
        %v273 = vmul.f32 %v257, %v257
        %v274 = vmul.f32 %v258, %v258
        %v275 = vmul.f32 %v259, %v259
        %v276 = vmul.f32 %v260, %v260
        %v277 = vmul.f32 %v261, %v261
        %v278 = vmul.f32 %v262, %v262
        %v279 = vmul.f32 %v263, %v263
        %v280 = vsub.f32 %v264, %v272
        %v281 = vsub.f32 %v265, %v273
        %v282 = vsub.f32 %v266, %v274
        %v283 = vsub.f32 %v267, %v275
        %v284 = vsub.f32 %v268, %v276
        %v285 = vsub.f32 %v269, %v277
        %v286 = vsub.f32 %v270, %v278
        %v287 = vsub.f32 %v271, %v279
        %v288 = vsub.f32 %v176, %v256
        %v289 = vsub.f32 %v177, %v256
        %v290 = vsub.f32 %v178, %v257
        %v291 = vsub.f32 %v179, %v257
        %v292 = vsub.f32 %v180, %v258
        %v293 = vsub.f32 %v181, %v258
        %v294 = vsub.f32 %v182, %v259
        %v295 = vsub.f32 %v183, %v259
        %v296 = vsub.f32 %v184, %v260
        %v297 = vsub.f32 %v185, %v260
        %v298 = vsub.f32 %v186, %v261
        %v299 = vsub.f32 %v187, %v261
        %v300 = vsub.f32 %v188, %v262
        %v301 = vsub.f32 %v189, %v262
        %v302 = vsub.f32 %v190, %v263
        %v303 = vsub.f32 %v191, %v263
        %v304 = vadd.f32 %v280, 1e-05
        %v305 = vadd.f32 %v281, 1e-05
        %v306 = vadd.f32 %v282, 1e-05
        %v307 = vadd.f32 %v283, 1e-05
        %v308 = vadd.f32 %v284, 1e-05
        %v309 = vadd.f32 %v285, 1e-05
        %v310 = vadd.f32 %v286, 1e-05
        %v311 = vadd.f32 %v287, 1e-05
        %v312 = vrsqrt.pop %v304
        %v313 = vrsqrt.pop %v305
        %v314 = vrsqrt.pop %v306
        %v315 = vrsqrt.pop %v307
        %v316 = vrsqrt.pop %v308
        %v317 = vrsqrt.pop %v309
        %v318 = vrsqrt.pop %v310
        %v319 = vrsqrt.pop %v311
        %v320 = vmul.f32 %v288, %v312
        %v321 = vmul.f32 %v289, %v312
        %v322 = vmul.f32 %v290, %v313
        %v323 = vmul.f32 %v291, %v313
        %v324 = vmul.f32 %v292, %v314
        %v325 = vmul.f32 %v293, %v314
        %v326 = vmul.f32 %v294, %v315
        %v327 = vmul.f32 %v295, %v315
        %v328 = vmul.f32 %v296, %v316
        %v329 = vmul.f32 %v297, %v316
        %v330 = vmul.f32 %v298, %v317
        %v331 = vmul.f32 %v299, %v317
        %v332 = vmul.f32 %v300, %v318
        %v333 = vmul.f32 %v301, %v318
        %v334 = vmul.f32 %v302, %v319
        %v335 = vmul.f32 %v303, %v319
        %v336 = vpack.c.bf16 %v322, %v320
        %v337 = vpack.c.bf16 %v323, %v321
        %v338 = vpack.c.bf16 %v326, %v324
        %v339 = vpack.c.bf16 %v327, %v325
        %v340 = vpack.c.bf16 %v330, %v328
        %v341 = vpack.c.bf16 %v331, %v329
        %v342 = vpack.c.bf16 %v334, %v332
        %v343 = vpack.c.bf16 %v335, %v333
        %v344 = vld [vmem:[%s1] sm:$0xf]
        %v345 = vld [vmem:[%s1 + $0x4] sm:$0xf]
        %v346 = vld [vmem:[%s1 + $0x8] sm:$0xf]
        %v347 = vld [vmem:[%s1 + $0xc] sm:$0xf]
        %v348 = vld [vmem:[%s1 + $0x10] sm:$0xf]
        %v349 = vld [vmem:[%s1 + $0x14] sm:$0xf]
        %v350 = vld [vmem:[%s1 + $0x18] sm:$0xf]
        %v351 = vld [vmem:[%s1 + $0x1c] sm:$0xf]
        %v352 = vld [vmem:[%s1 + $0x20] sm:$0xf]
        %v353 = vld [vmem:[%s1 + $0x24] sm:$0xf]
        %v354 = vld [vmem:[%s1 + $0x28] sm:$0xf]
        %v355 = vld [vmem:[%s1 + $0x2c] sm:$0xf]
        %v356 = vld [vmem:[%s1 + $0x30] sm:$0xf]
        %v357 = vld [vmem:[%s1 + $0x34] sm:$0xf]
        %v358 = vld [vmem:[%s1 + $0x38] sm:$0xf]
        %v359 = vld [vmem:[%s1 + $0x3c] sm:$0xf]
        %v360 = vld [vmem:[%s1 + $0x40] sm:$0xf]
        %v361 = vld [vmem:[%s1 + $0x44] sm:$0xf]
        %v362 = vld [vmem:[%s1 + $0x48] sm:$0xf]
        %v363 = vld [vmem:[%s1 + $0x4c] sm:$0xf]
        %v364 = vld [vmem:[%s1 + $0x50] sm:$0xf]
        %v365 = vld [vmem:[%s1 + $0x54] sm:$0xf]
        %v366 = vld [vmem:[%s1 + $0x58] sm:$0xf]
        %v367 = vld [vmem:[%s1 + $0x5c] sm:$0xf]
        %v368 = vld [vmem:[%s1 + $0x60] sm:$0xf]
        %v369 = vld [vmem:[%s1 + $0x64] sm:$0xf]
        %v370 = vld [vmem:[%s1 + $0x68] sm:$0xf]
        %v371 = vld [vmem:[%s1 + $0x6c] sm:$0xf]
        %v372 = vld [vmem:[%s1 + $0x70] sm:$0xf]
        %v373 = vld [vmem:[%s1 + $0x74] sm:$0xf]
        %v374 = vld [vmem:[%s1 + $0x78] sm:$0xf]
        %v375 = vld [vmem:[%s1 + $0x7c] sm:$0xf]
        %v376 = vld [vmem:[%s2] sm:$0x1]
        %v378 = vlaneseq
        %v379 = vshrl.u32 %v378, 7
        %v380 = vsub.s32 0, %v379
        %v381 = vrot.slane %v376, %v380
        %v415 = vunpack.c.l.b16 %v344
        %v416 = vunpack.c.l.b16 %v345
        %v417 = vunpack.c.l.b16 %v346
        %v418 = vunpack.c.l.b16 %v347
        %v419 = vunpack.c.l.b16 %v348
        %v420 = vunpack.c.l.b16 %v349
        %v421 = vunpack.c.l.b16 %v350
        %v422 = vunpack.c.l.b16 %v351
        %v423 = vunpack.c.l.b16 %v352
        %v424 = vunpack.c.l.b16 %v353
        %v425 = vunpack.c.l.b16 %v354
        %v426 = vunpack.c.l.b16 %v355
        %v427 = vunpack.c.l.b16 %v356
        %v428 = vunpack.c.l.b16 %v357
        %v429 = vunpack.c.l.b16 %v358
        %v430 = vunpack.c.l.b16 %v359
        %v431 = vunpack.c.l.b16 %v360
        %v432 = vunpack.c.l.b16 %v361
        %v433 = vunpack.c.l.b16 %v362
        %v434 = vunpack.c.l.b16 %v363
        %v435 = vunpack.c.l.b16 %v364
        %v436 = vunpack.c.l.b16 %v365
        %v437 = vunpack.c.l.b16 %v366
        %v438 = vunpack.c.l.b16 %v367
        %v439 = vunpack.c.l.b16 %v368
        %v440 = vunpack.c.l.b16 %v369
        %v441 = vunpack.c.l.b16 %v370
        %v442 = vunpack.c.l.b16 %v371
        %v443 = vunpack.c.l.b16 %v372
        %v444 = vunpack.c.l.b16 %v373
        %v445 = vunpack.c.l.b16 %v374
        %v446 = vunpack.c.l.b16 %v375
        %v447 = vpack.c.b16 %v416, %v415
        %v448 = vpack.c.b16 %v418, %v417
        %v449 = vpack.c.b16 %v420, %v419
        %v450 = vpack.c.b16 %v422, %v421
        %v451 = vpack.c.b16 %v424, %v423
        %v452 = vpack.c.b16 %v426, %v425
        %v453 = vpack.c.b16 %v428, %v427
        %v454 = vpack.c.b16 %v430, %v429
        %v455 = vpack.c.b16 %v432, %v431
        %v456 = vpack.c.b16 %v434, %v433
        %v457 = vpack.c.b16 %v436, %v435
        %v458 = vpack.c.b16 %v438, %v437
        %v459 = vpack.c.b16 %v440, %v439
        %v460 = vpack.c.b16 %v442, %v441
        %v461 = vpack.c.b16 %v444, %v443
        %v462 = vpack.c.b16 %v446, %v445
        %479 = vmatprep.subr.bf16.mxu0 0
        %480 = vmatpush1.bf16.msra.mxu0 %v454
        %481 = vmatprep.subr.bf16.mxu0 0
        %482 = vmatpush1.bf16.msra.mxu0 %v453
        %483 = vmatprep.subr.bf16.mxu0 0
        %484 = vmatpush1.bf16.msra.mxu0 %v452
        %485 = vmatprep.subr.bf16.mxu0 0
        %486 = vmatpush1.bf16.msra.mxu0 %v451
        %487 = vmatprep.subr.bf16.mxu0 0
        %488 = vmatpush1.bf16.msra.mxu0 %v450
        %489 = vmatprep.subr.bf16.mxu0 0
        %490 = vmatpush1.bf16.msra.mxu0 %v449
        %491 = vmatprep.subr.bf16.mxu0 0
        %492 = vmatpush1.bf16.msra.mxu0 %v448
        %493 = vmatprep.subr.bf16.mxu0 0
        %494 = vmatpush1.bf16.msra.mxu0 %v447
        %495 = vmatprep.subr.bf16.mxu0 0
        %496 = vmatpush2.bf16.msra.mxu0 %v462
        %497 = vmatprep.subr.bf16.mxu0 0
        %498 = vmatpush2.bf16.msra.mxu0 %v461
        %499 = vmatprep.subr.bf16.mxu0 0
        %500 = vmatpush2.bf16.msra.mxu0 %v460
        %501 = vmatprep.subr.bf16.mxu0 0
        %502 = vmatpush2.bf16.msra.mxu0 %v459
        %503 = vmatprep.subr.bf16.mxu0 0
        %504 = vmatpush2.bf16.msra.mxu0 %v458
        %505 = vmatprep.subr.bf16.mxu0 0
        %506 = vmatpush2.bf16.msra.mxu0 %v457
        %507 = vmatprep.subr.bf16.mxu0 0
        %508 = vmatpush2.bf16.msra.mxu0 %v456
        %509 = vmatprep.subr.bf16.mxu0 0
        %510 = vmatpush2.bf16.msra.mxu0 %v455
        %511 = vmatprep.mubr.bf16.mxu0 %v337
        %512 = vmatmul.mubr.bf16.gmra.mxu0 %v336
        %v513 = vpop.f32.mrf.mxu0
        %v514 = vadd.f32 %v381, %v513
        %v515 = vpop.f32.mrf.mxu0
        %v516 = vpop.f32.mrf.mxu0
        %v517 = vadd.f32 %v381, %v516
        %v518 = vpop.f32.mrf.mxu0
        %519 = vmatprep.mubr.bf16.mxu0 %v339
        %520 = vmatmul.mubr.bf16.gmra.mxu0 %v338
        %v521 = vpop.f32.mrf.mxu0
        %v522 = vadd.f32 %v381, %v521
        %v523 = vpop.f32.mrf.mxu0
        %v524 = vpop.f32.mrf.mxu0
        %v525 = vadd.f32 %v381, %v524
        %v526 = vpop.f32.mrf.mxu0
        %527 = vmatprep.mubr.bf16.mxu0 %v341
        %528 = vmatmul.mubr.bf16.gmra.mxu0 %v340
        %v529 = vpop.f32.mrf.mxu0
        %v530 = vadd.f32 %v381, %v529
        %v531 = vpop.f32.mrf.mxu0
        %v532 = vpop.f32.mrf.mxu0
        %v533 = vadd.f32 %v381, %v532
        %v534 = vpop.f32.mrf.mxu0
        %535 = vmatprep.mubr.bf16.mxu0 %v343
        %536 = vmatmul.mubr.bf16.gmra.mxu0 %v342
        %v537 = vpop.f32.mrf.mxu0
        %v538 = vadd.f32 %v381, %v537
        %v539 = vpop.f32.mrf.mxu0
        %v540 = vpop.f32.mrf.mxu0
        %v541 = vadd.f32 %v381, %v540
        %v542 = vpop.f32.mrf.mxu0
        %543 = vdwg.mxu0
        %544 = vst [vmem:[%s166] sm:$0xff] %v514
        %545 = vst [vmem:[%s166 + $0x8] sm:$0xff] %v517
        %546 = vst [vmem:[%s166 + $0x10] sm:$0xff] %v522
        %547 = vst [vmem:[%s166 + $0x18] sm:$0xff] %v525
        %548 = vst [vmem:[%s166 + $0x20] sm:$0xff] %v530
        %549 = vst [vmem:[%s166 + $0x28] sm:$0xff] %v533
        %550 = vst [vmem:[%s166 + $0x30] sm:$0xff] %v538
        %551 = vst [vmem:[%s166 + $0x38] sm:$0xff] %v541
        %s552 = sand.u32 %s93, 1
        %s553 = scalar_lea.sflag [#allocation3], %s552
        %s554 = sand.u32 %s93, 1
        %s555 = smul.addr %s554, 64
        %s556 = scalar_lea.vmem [#allocation2], %s555
        // Predicated region
        $region33: #{patch_merging2d_forward.1} parent=31 // pred_check
          %p557 = pneg %p103
        $region34: #{patch_merging2d_forward.1} parent=31 // pred_check_branch
          %559 = sbr.rel (%p557) target = $region36
        $region35: #{patch_merging2d_forward.1} parent=31 // pred_region
          %s560 = smul.u32 8, %s17
          %s562 = ssub.s32 1024, 1024
          %563 = vsyncadd %s553, %s562
          %s564 = smul.addr %s560, 128
          %s565 = scalar_lea.hbm %s3, %s564
          %s566 = sshll.u32 %s556, 4
          %s567 = int_to_ptr.vmem [resolvable:$true] %s566
          %572 = dma.vmem_to_hbm [thread:$0]  %s567, 1024, %s565, %s553, 128, 128, 8
        $region36: #{patch_merging2d_forward.1} parent=31 // pred_fallthru
          _
      $region32: #{patch_merging2d_forward.1} parent=5 // pred_fallthru
        _
      %p573 = scmp.le.s32.totalorder 2, %s12
      // Predicated region
      $region37: #{patch_merging2d_forward.1} parent=5 // pred_check
        %p574 = pneg %p573
      $region38: #{patch_merging2d_forward.1} parent=5 // pred_check_branch
        %576 = sbr.rel (%p574) target = $region40
      $region39: #{patch_merging2d_forward.1} parent=5 // pred_region
        %s577 = ssub.s32 %s12, 2
        // Predicated region
        $region41: #{patch_merging2d_forward.1} parent=39 // pred_check
          %p578 = pneg %p109
        $region42: #{patch_merging2d_forward.1} parent=39 // pred_check_branch
          %580 = sbr.rel (%p578) target = $region44
        $region43: #{patch_merging2d_forward.1} parent=39 // pred_region
          %s581 = sand.u32 %s94, 1
          %s582 = scalar_lea.sflag [#allocation3], %s581
          %s583 = sand.u32 %s94, 1
          %s584 = smul.addr %s583, 64
          %s585 = scalar_lea.vmem [#allocation2], %s584
          %586 = dma.done %s582, 1024
        $region44: #{patch_merging2d_forward.1} parent=39 // pred_fallthru
          _
      $region40: #{patch_merging2d_forward.1} parent=5 // pred_fallthru
        _
    $region6: #{patch_merging2d_forward.1} parent=1 // loop_footer
      %s16 = sadd.s32 1, %s12
    $region7: #{patch_merging2d_forward.1} parent=1 // loop_footer_branch
      %11 = sbr.rel target = $region3
    $region8: #{patch_merging2d_forward.1} parent=1 // loop_exit
      _
    %587 = vsyncpa [#allocation3], 1
    %s588 = scalar_lea.sflag [#allocation3], 1
    %589 = vsyncpa %s588, 1

</llo_original>
